<compile_context>
chip_gen: v6e
topology: v6e:2x2x1
jax: 0.10.0
libtpu: 0.0.40
codegen_flags: <defaults>
</compile_context>

<pallas_src>
import jax
import jax.numpy as jnp
from jax.experimental import pallas as pl
from jax.experimental.pallas import tpu as pltpu


# Target double-buffered working set per grid step (well under every
# generation's default scoped-VMEM limit: 16 MiB v5e, 32 MiB v6e/v7x).
_VMEM_BUDGET_BYTES = 8 * 1024 * 1024


def _round_up(x, m):
    return ((x + m - 1) // m) * m


def _make_kernel(n_pairs, rank):
    """Kernel specialized on the number of enabled (mask, candidate) pairs.

    Ref order: [m0, c0, m1, c1, ..., i1L_ch0, out]
      m*        : (1, 1, R, 128) or (1, 1, TS)   per-pixel match mask
      c*        : (1, C, R, 128) or (1, C, TS)   candidate image tile
      i1L_ch0   : (1, 1, R, 128) or (1, 1, TS)   luminance channel-0 tile
      out       : (1, C, R, 128) or (1, C, TS)
    """
    def kernel(*refs):
        out_ref = refs[-1]
        i1l_ref = refs[-2]
        if n_pairs == 0:
            acc = jnp.full(out_ref.shape, 0.5, out_ref.dtype)
        else:
            # Fold the 0.5 init into the first pair (one fewer full-tile broadcast).
            acc = refs[0][...] * (refs[1][...] - 0.5) + 0.5
            for p in range(1, n_pairs):          # static Python loop (specialized)
                acc = acc + refs[2 * p][...] * (refs[2 * p + 1][...] - 0.5)
        out_ref[...] = acc.astype(out_ref.dtype)
        # i1c_init[:, 0:1] = i1L[:, 0:1]  (channel-0 overwrite)
        if rank == 4:
            out_ref[:, 0:1, :, :] = i1l_ref[...].astype(out_ref.dtype)
        else:
            out_ref[:, 0:1, :] = i1l_ref[...].astype(out_ref.dtype)
    return kernel


def gen_init_image(data, config):
    """JAX equivalent of Gen_Init_Image.forward.

    data: dict of jnp arrays (NCHW); returns a new dict (no mutation).
    """
    use_flow = 'flow' in config['init_image']
    use_glob = 'glob' in config['init_image']
    use_loc = 'loc' in config['init_image']

    # Shape/dtype come from i0c (torch.full_like(data['i0c'], 0.5)); its data
    # is never read, so it is NOT passed to the kernel.
    B, C, H, W = data['i0c'].shape
    dt = data['i0c'].dtype
    itemsize = jnp.dtype(dt).itemsize
    spatial = H * W

    i1l = data['i1L']
    if i1l.shape[0] != B or i1l.shape[2:] != (H, W):
        raise ValueError(f"i1L shape {i1l.shape} incompatible with i0c {data['i0c'].shape}")

    branches = [
        (use_flow, 'matched10_img_flow', 'i0cw'),
        (use_glob, 'matched10_img_glob', 'colcands1_best_glob'),
        (use_loc, 'matched10_img_loc', 'colcands1_best_loc'),
    ]
    enabled = [(m, c) for e, m, c in branches if e]
    n_pairs = len(enabled)

    if spatial % 128 == 0:
        # ---- dense 4D layout: spatial fills sublanes AND lanes ----
        rank = 4
        rows = spatial // 128
        # planes of (R, 128) per grid step: masks + candidates + i1L + out
        planes = n_pairs * (C + 1) + 1 + C
        bytes_per_row = planes * 128 * itemsize * 2          # double-buffered
        r_max = max(8, (_VMEM_BUDGET_BYTES // bytes_per_row) // 8 * 8)
        R = rows if rows <= r_max else r_max
        # v7x megacore: keep >= 2 parallel grid steps when possible.
        if B * pl.cdiv(rows, R) < 2 and rows > 8:
            R = _round_up(pl.cdiv(rows, 2), 8)
        n_tiles = pl.cdiv(rows, R)

        def prep(x):
            return x.reshape(x.shape[0], x.shape[1], rows, 128)   # free reshape

        mask_spec = pl.BlockSpec((1, 1, R, 128), lambda b, s: (b, 0, s, 0))
        img_spec = pl.BlockSpec((1, C, R, 128), lambda b, s: (b, 0, s, 0))

        inputs, in_specs = [], []
        for mkey, ckey in enabled:
            inputs.append(prep(data[mkey]))
            in_specs.append(mask_spec)
            inputs.append(prep(data[ckey]))
            in_specs.append(img_spec)
        # Full i1L; index_map selects channel 0 -> only that plane is DMA'd.
        inputs.append(prep(i1l))
        in_specs.append(mask_spec)

        out_shape = jax.ShapeDtypeStruct((B, C, rows, 128), dt)
        out_spec = img_spec
    else:
        # ---- fallback: (B, C, spatial), spatial tiled along lanes only ----
        rank = 3
        # account for 8-sublane padding of the channel dim in VMEM
        planes = n_pairs * (_round_up(C, 8) + 8) + 8 + _round_up(C, 8)
        bytes_per_lane = planes * itemsize * 2               # double-buffered
        ts_max = max(128, (_VMEM_BUDGET_BYTES // bytes_per_lane) // 128 * 128)
        ts = spatial if spatial <= ts_max else ts_max
        if B * pl.cdiv(spatial, ts) < 2 and spatial > 128:
            ts = _round_up(pl.cdiv(spatial, 2), 128)
        n_tiles = pl.cdiv(spatial, ts)

        def prep(x):
            return x.reshape(x.shape[0], x.shape[1], spatial)     # free reshape

        mask_spec = pl.BlockSpec((1, 1, ts), lambda b, s: (b, 0, s))
        img_spec = pl.BlockSpec((1, C, ts), lambda b, s: (b, 0, s))

        inputs, in_specs = [], []
        for mkey, ckey in enabled:
            inputs.append(prep(data[mkey]))
            in_specs.append(mask_spec)
            inputs.append(prep(data[ckey]))
            in_specs.append(img_spec)
        # Channel dim is second-minor here, so slice channel 0 in the wrapper
        # (small plane copy; only taken on non-128-aligned images).
        inputs.append(prep(i1l[:, 0:1]))
        in_specs.append(mask_spec)

        out_shape = jax.ShapeDtypeStruct((B, C, spatial), dt)
        out_spec = img_spec

    read_bytes = (n_pairs * B * spatial * itemsize            # masks
                  + n_pairs * B * C * spatial * itemsize      # candidates
                  + B * spatial * itemsize)                    # i1L channel 0
    write_bytes = B * C * spatial * itemsize
    cost = pl.CostEstimate(
        flops=3 * n_pairs * B * C * spatial,
        transcendentals=0,
        bytes_accessed=read_bytes + write_bytes,
    )

    out_flat = pl.pallas_call(
        _make_kernel(n_pairs, rank),
        out_shape=out_shape,
        grid_spec=pltpu.PrefetchScalarGridSpec(
            num_scalar_prefetch=0,
            grid=(B, n_tiles),
            in_specs=in_specs,
            out_specs=out_spec,
        ),
        compiler_params=pltpu.CompilerParams(
            dimension_semantics=("parallel", "parallel")),
        cost_estimate=cost,
    )(*inputs)

    i1c_init = out_flat.reshape(B, C, H, W)

    out = dict(data)
    if use_flow:
        out['i1c_colcand_flow_init'] = data['i0cw']
    if use_glob:
        out['i1c_colcand_glob_init'] = data['colcands1_best_glob']
    if use_loc:
        out['i1c_colcand_loc_init'] = data['colcands1_best_loc']
    out['i1c_init'] = i1c_init
    return out


def _reference(data, config):
    """Pure-JAX reference mirroring the PyTorch forward."""
    i1c_init = jnp.full_like(data['i0c'], 0.5)
    if 'flow' in config['init_image']:
        i1c_init = i1c_init + data['matched10_img_flow'] * (data['i0cw'] - 0.5)
    if 'glob' in config['init_image']:
        i1c_init = i1c_init + data['matched10_img_glob'] * (data['colcands1_best_glob'] - 0.5)
    if 'loc' in config['init_image']:
        i1c_init = i1c_init + data['matched10_img_loc'] * (data['colcands1_best_loc'] - 0.5)
    i1c_init = i1c_init.at[:, 0:1].set(data['i1L'][:, 0:1])
    return i1c_init


def _make_data(key, B, C, H, W):
    ks = jax.random.split(key, 8)
    return {
        'i0c': jax.random.uniform(ks[0], (B, C, H, W), jnp.float32),
        'i0cw': jax.random.uniform(ks[1], (B, C, H, W), jnp.float32),
        'colcands1_best_glob': jax.random.uniform(ks[2], (B, C, H, W), jnp.float32),
        'colcands1_best_loc': jax.random.uniform(ks[3], (B, C, H, W), jnp.float32),
        'matched10_img_flow': jax.random.uniform(ks[4], (B, 1, H, W), jnp.float32),
        'matched10_img_glob': jax.random.uniform(ks[5], (B, 1, H, W), jnp.float32),
        'matched10_img_loc': jax.random.uniform(ks[6], (B, 1, H, W), jnp.float32),
        'i1L': jax.random.uniform(ks[7], (B, C, H, W), jnp.float32),
    }


if __name__ == "__main__":
    key = jax.random.PRNGKey(0)
    k_main, k_odd = jax.random.split(key)

    # Primary (128-aligned) path: B=2, C=4, 16x16 spatial.
    data = _make_data(k_main, 2, 4, 16, 16)

    # Full configuration (flow + glob + loc).
    config_full = {'init_image': ['flow', 'glob', 'loc']}
    out = gen_init_image(data, config_full)
    result = jax.block_until_ready(out['i1c_init'])
    ref = _reference(data, config_full)
    assert jnp.allclose(result, ref, atol=1e-6), "mismatch vs reference (full config)"
    assert out['i1c_colcand_flow_init'] is data['i0cw']
    assert out['i1c_colcand_glob_init'] is data['colcands1_best_glob']
    assert out['i1c_colcand_loc_init'] is data['colcands1_best_loc']

    # Partial configuration (static specialization path).
    config_glob = {'init_image': ['glob']}
    out2 = gen_init_image(data, config_glob)
    result2 = jax.block_until_ready(out2['i1c_init'])
    ref2 = _reference(data, config_glob)
    assert jnp.allclose(result2, ref2, atol=1e-6), "mismatch vs reference (glob-only)"
    assert out2['i1c_colcand_glob_init'] is data['colcands1_best_glob']
    assert 'i1c_colcand_flow_init' not in out2
    assert 'i1c_colcand_loc_init' not in out2

    # Empty configuration: pure 0.5 image + i1L channel 0.
    config_none = {'init_image': []}
    out3 = gen_init_image(data, config_none)
    result3 = jax.block_until_ready(out3['i1c_init'])
    ref3 = _reference(data, config_none)
    assert jnp.allclose(result3, ref3, atol=1e-6), "mismatch vs reference (empty config)"

    # Non-128-aligned spatial exercises the lane-tiled fallback (no padding copies).
    data_odd = _make_data(k_odd, 2, 4, 10, 10)
    out4 = gen_init_image(data_odd, config_full)
    result4 = jax.block_until_ready(out4['i1c_init'])
    ref4 = _reference(data_odd, config_full)
    assert jnp.allclose(result4, ref4, atol=1e-6), "mismatch vs reference (odd spatial)"

    print("KERNEL_OK")
</pallas_src>

<mosaic_0001>
module attributes {stable_mosaic.version = 11 : i64} {
  func.func @kernel(%arg0: i32, %arg1: i32, %arg2: memref<1x1x2x128xf32, #tpu.memory_space<vmem>>, %arg3: memref<1x4x2x128xf32, #tpu.memory_space<vmem>>, %arg4: memref<1x1x2x128xf32, #tpu.memory_space<vmem>>, %arg5: memref<1x4x2x128xf32, #tpu.memory_space<vmem>>, %arg6: memref<1x1x2x128xf32, #tpu.memory_space<vmem>>, %arg7: memref<1x4x2x128xf32, #tpu.memory_space<vmem>>, %arg8: memref<1x1x2x128xf32, #tpu.memory_space<vmem>>, %arg9: memref<1x4x2x128xf32, #tpu.memory_space<vmem>>) attributes {dimension_semantics = [#tpu.dimension_semantics<parallel>, #tpu.dimension_semantics<parallel>], iteration_bounds = array<i64: 2, 1>, scalar_prefetch = 0 : i64, scratch_operands = 0 : i64, tpu.core_type = #tpu.core_type<tc>, window_params = [{transform_indices = @transform_0, window_bounds = array<i64: 1, 1, 2, 128>}, {transform_indices = @transform_1, window_bounds = array<i64: 1, 4, 2, 128>}, {transform_indices = @transform_2, window_bounds = array<i64: 1, 1, 2, 128>}, {transform_indices = @transform_3, window_bounds = array<i64: 1, 4, 2, 128>}, {transform_indices = @transform_4, window_bounds = array<i64: 1, 1, 2, 128>}, {transform_indices = @transform_5, window_bounds = array<i64: 1, 4, 2, 128>}, {transform_indices = @transform_6, window_bounds = array<i64: 1, 1, 2, 128>}, {transform_indices = @transform_7, window_bounds = array<i64: 1, 4, 2, 128>}]} {
    %c0 = arith.constant 0 : index
    %c0_0 = arith.constant 0 : index
    %c0_1 = arith.constant 0 : index
    %c0_2 = arith.constant 0 : index
    %0 = vector.load %arg2[%c0, %c0_0, %c0_1, %c0_2] : memref<1x1x2x128xf32, #tpu.memory_space<vmem>>, vector<1x1x2x128xf32>
    %c0_3 = arith.constant 0 : index
    %c0_4 = arith.constant 0 : index
    %c0_5 = arith.constant 0 : index
    %c0_6 = arith.constant 0 : index
    %1 = vector.load %arg3[%c0_3, %c0_4, %c0_5, %c0_6] : memref<1x4x2x128xf32, #tpu.memory_space<vmem>>, vector<1x4x2x128xf32>
    %cst = arith.constant 5.000000e-01 : f32
    %2 = vector.broadcast %cst : f32 to vector<1x4x2x128xf32>
    %3 = arith.subf %1, %2 : vector<1x4x2x128xf32>
    %4 = vector.broadcast %0 : vector<1x1x2x128xf32> to vector<1x4x2x128xf32>
    %5 = arith.mulf %4, %3 : vector<1x4x2x128xf32>
    %cst_7 = arith.constant 5.000000e-01 : f32
    %6 = vector.broadcast %cst_7 : f32 to vector<1x4x2x128xf32>
    %7 = arith.addf %5, %6 : vector<1x4x2x128xf32>
    %c0_8 = arith.constant 0 : index
    %c0_9 = arith.constant 0 : index
    %c0_10 = arith.constant 0 : index
    %c0_11 = arith.constant 0 : index
    %8 = vector.load %arg4[%c0_8, %c0_9, %c0_10, %c0_11] : memref<1x1x2x128xf32, #tpu.memory_space<vmem>>, vector<1x1x2x128xf32>
    %c0_12 = arith.constant 0 : index
    %c0_13 = arith.constant 0 : index
    %c0_14 = arith.constant 0 : index
    %c0_15 = arith.constant 0 : index
    %9 = vector.load %arg5[%c0_12, %c0_13, %c0_14, %c0_15] : memref<1x4x2x128xf32, #tpu.memory_space<vmem>>, vector<1x4x2x128xf32>
    %cst_16 = arith.constant 5.000000e-01 : f32
    %10 = vector.broadcast %cst_16 : f32 to vector<1x4x2x128xf32>
    %11 = arith.subf %9, %10 : vector<1x4x2x128xf32>
    %12 = vector.broadcast %8 : vector<1x1x2x128xf32> to vector<1x4x2x128xf32>
    %13 = arith.mulf %12, %11 : vector<1x4x2x128xf32>
    %14 = arith.addf %7, %13 : vector<1x4x2x128xf32>
    %c0_17 = arith.constant 0 : index
    %c0_18 = arith.constant 0 : index
    %c0_19 = arith.constant 0 : index
    %c0_20 = arith.constant 0 : index
    %15 = vector.load %arg6[%c0_17, %c0_18, %c0_19, %c0_20] : memref<1x1x2x128xf32, #tpu.memory_space<vmem>>, vector<1x1x2x128xf32>
    %c0_21 = arith.constant 0 : index
    %c0_22 = arith.constant 0 : index
    %c0_23 = arith.constant 0 : index
    %c0_24 = arith.constant 0 : index
    %16 = vector.load %arg7[%c0_21, %c0_22, %c0_23, %c0_24] : memref<1x4x2x128xf32, #tpu.memory_space<vmem>>, vector<1x4x2x128xf32>
    %cst_25 = arith.constant 5.000000e-01 : f32
    %17 = vector.broadcast %cst_25 : f32 to vector<1x4x2x128xf32>
    %18 = arith.subf %16, %17 : vector<1x4x2x128xf32>
    %19 = vector.broadcast %15 : vector<1x1x2x128xf32> to vector<1x4x2x128xf32>
    %20 = arith.mulf %19, %18 : vector<1x4x2x128xf32>
    %21 = arith.addf %14, %20 : vector<1x4x2x128xf32>
    %c0_26 = arith.constant 0 : index
    %c0_27 = arith.constant 0 : index
    %c0_28 = arith.constant 0 : index
    %c0_29 = arith.constant 0 : index
    %22 = vector.load %arg9[%c0_26, %c0_27, %c0_28, %c0_29] : memref<1x4x2x128xf32, #tpu.memory_space<vmem>>, vector<1x4x2x128xf32>
    tpu.vector_store %arg9[%c0_26, %c0_27, %c0_28, %c0_29], %21 {strides = array<i32>} : memref<1x4x2x128xf32, #tpu.memory_space<vmem>>, vector<1x4x2x128xf32>,
    %c0_30 = arith.constant 0 : index
    %c0_31 = arith.constant 0 : index
    %c0_32 = arith.constant 0 : index
    %c0_33 = arith.constant 0 : index
    %23 = vector.load %arg8[%c0_30, %c0_31, %c0_32, %c0_33] : memref<1x1x2x128xf32, #tpu.memory_space<vmem>>, vector<1x1x2x128xf32>
    %c0_34 = arith.constant 0 : index
    %c0_35 = arith.constant 0 : index
    %c0_36 = arith.constant 0 : index
    %c0_37 = arith.constant 0 : index
    %24 = vector.load %arg9[%c0_34, %c0_35, %c0_36, %c0_37] : memref<1x4x2x128xf32, #tpu.memory_space<vmem>>, vector<1x1x2x128xf32>
    tpu.vector_store %arg9[%c0_34, %c0_35, %c0_36, %c0_37], %23 {strides = array<i32>} : memref<1x4x2x128xf32, #tpu.memory_space<vmem>>, vector<1x1x2x128xf32>,
    return
  }
  func.func @transform_0(%arg0: i32, %arg1: i32) -> (i32, i32, i32, i32) {
    %c0_i32 = arith.constant 0 : i32
    %c0_i32_0 = arith.constant 0 : i32
    %c0_i32_1 = arith.constant 0 : i32
    return %arg0, %c0_i32, %arg1, %c0_i32_0 : i32, i32, i32, i32
  }
  func.func @transform_1(%arg0: i32, %arg1: i32) -> (i32, i32, i32, i32) {
    %c0_i32 = arith.constant 0 : i32
    %c0_i32_0 = arith.constant 0 : i32
    %c0_i32_1 = arith.constant 0 : i32
    return %arg0, %c0_i32, %arg1, %c0_i32_0 : i32, i32, i32, i32
  }
  func.func @transform_2(%arg0: i32, %arg1: i32) -> (i32, i32, i32, i32) {
    %c0_i32 = arith.constant 0 : i32
    %c0_i32_0 = arith.constant 0 : i32
    %c0_i32_1 = arith.constant 0 : i32
    return %arg0, %c0_i32, %arg1, %c0_i32_0 : i32, i32, i32, i32
  }
  func.func @transform_3(%arg0: i32, %arg1: i32) -> (i32, i32, i32, i32) {
    %c0_i32 = arith.constant 0 : i32
    %c0_i32_0 = arith.constant 0 : i32
    %c0_i32_1 = arith.constant 0 : i32
    return %arg0, %c0_i32, %arg1, %c0_i32_0 : i32, i32, i32, i32
  }
  func.func @transform_4(%arg0: i32, %arg1: i32) -> (i32, i32, i32, i32) {
    %c0_i32 = arith.constant 0 : i32
    %c0_i32_0 = arith.constant 0 : i32
    %c0_i32_1 = arith.constant 0 : i32
    return %arg0, %c0_i32, %arg1, %c0_i32_0 : i32, i32, i32, i32
  }
  func.func @transform_5(%arg0: i32, %arg1: i32) -> (i32, i32, i32, i32) {
    %c0_i32 = arith.constant 0 : i32
    %c0_i32_0 = arith.constant 0 : i32
    %c0_i32_1 = arith.constant 0 : i32
    return %arg0, %c0_i32, %arg1, %c0_i32_0 : i32, i32, i32, i32
  }
  func.func @transform_6(%arg0: i32, %arg1: i32) -> (i32, i32, i32, i32) {
    %c0_i32 = arith.constant 0 : i32
    %c0_i32_0 = arith.constant 0 : i32
    %c0_i32_1 = arith.constant 0 : i32
    return %arg0, %c0_i32, %arg1, %c0_i32_0 : i32, i32, i32, i32
  }
  func.func @transform_7(%arg0: i32, %arg1: i32) -> (i32, i32, i32, i32) {
    %c0_i32 = arith.constant 0 : i32
    %c0_i32_0 = arith.constant 0 : i32
    %c0_i32_1 = arith.constant 0 : i32
    return %arg0, %c0_i32, %arg1, %c0_i32_0 : i32, i32, i32, i32
  }
}

</mosaic_0001>

<llo_original>
// kernel: tpu_custom_call.1
$region0: #{tpu_custom_call.1}
  #allocation0 [shape = 'u32[]', space=smem, size = 0x4, offset = 0x4, fixed_abs, tag = 'smem constant byte address 0x4 - core index']
  #allocation1 [shape = 'u32[144,128]{1,0:T(1,128)}', space=vmem, size = 0x12000, scoped, tag = 'internal scratch']
  %s0 = inlined_call_operand.hbm [shape: f32[2,1,2,128], index: 0, kind: input, shape index: {}]
  %s1 = inlined_call_operand.hbm [shape: f32[2,4,2,128], index: 1, kind: input, shape index: {}]
  %s2 = inlined_call_operand.hbm [shape: f32[2,1,2,128], index: 2, kind: input, shape index: {}]
  %s3 = inlined_call_operand.hbm [shape: f32[2,4,2,128], index: 3, kind: input, shape index: {}]
  %s4 = inlined_call_operand.vmem [shape: f32[2,1,2,128], index: 4, kind: input, shape index: {}]
  %s5 = inlined_call_operand.hbm [shape: f32[2,4,2,128], index: 5, kind: input, shape index: {}]
  %s6 = inlined_call_operand.hbm [shape: f32[2,4,2,128], index: 6, kind: input, shape index: {}]
  %s7 = inlined_call_operand.hbm [shape: f32[2,4,2,128], index: 7, kind: output, shape index: {}]
  %s8 = sld [smem:[#allocation0]]
  $region85: #{tpu_custom_call.1} parent=0
    _
  %s10 = ssub.s32 1, %s8
  %s11 = scalar_select 0, %s10, %s8
  $region1: #{tpu_custom_call.1} parent=0
    #allocation2 [shape = 'u8[2048]{0}', space=vmem, size = 0x800, scoped, tag = 'input window, operand 0']
    #allocation3 [shape = 's32[2]{0}', space=sflag, size = 0x8, scoped, tag = 'scoped memory for tpu_custom_call.1']
    #allocation4 [shape = 's32[2]{0}', space=sflag, size = 0x8, scoped, tag = 'scoped memory for tpu_custom_call.1']
    #allocation5 [shape = 'u8[8192]{0}', space=vmem, size = 0x2000, scoped, tag = 'input window, operand 1']
    #allocation6 [shape = 's32[2]{0}', space=sflag, size = 0x8, scoped, tag = 'scoped memory for tpu_custom_call.1']
    #allocation7 [shape = 'u8[2048]{0}', space=vmem, size = 0x800, scoped, tag = 'input window, operand 2']
    #allocation8 [shape = 'u8[8192]{0}', space=vmem, size = 0x2000, scoped, tag = 'input window, operand 3']
    #allocation9 [shape = 's32[2]{0}', space=sflag, size = 0x8, scoped, tag = 'scoped memory for tpu_custom_call.1']
    #allocation10 [shape = 'u8[8192]{0}', space=vmem, size = 0x2000, scoped, tag = 'input window, operand 5']
    #allocation11 [shape = 'u8[2048]{0}', space=vmem, size = 0x800, scoped, tag = 'input window, operand 6']
    #allocation12 [shape = 's32[2]{0}', space=sflag, size = 0x8, scoped, tag = 'scoped memory for tpu_custom_call.1']
    #allocation13 [shape = 'u8[8192]{0}', space=vmem, size = 0x2000, scoped, tag = 'output window, operand 0']
    %12 = vsyncpa [#allocation3], 0
    %s13 = scalar_lea.sflag [#allocation3], 1
    %14 = vsyncpa %s13, 0
    %15 = vsyncpa [#allocation6], 0
    %s16 = scalar_lea.sflag [#allocation6], 1
    %17 = vsyncpa %s16, 0
    %18 = vsyncpa [#allocation9], 0
    %s19 = scalar_lea.sflag [#allocation9], 1
    %20 = vsyncpa %s19, 0
    %21 = vsyncpa [#allocation12], 0
    %s22 = scalar_lea.sflag [#allocation12], 1
    %23 = vsyncpa %s22, 0
    %24 = vsyncpa [#allocation4], 0
    %s25 = scalar_lea.sflag [#allocation4], 1
    %26 = vsyncpa %s25, 0
    loop: start=0, step=1, limit=4
    $region2: #{tpu_custom_call.1} parent=1 // loop_pre_header
      _
    $region3: #{tpu_custom_call.1} parent=1 // loop_header
      %s28 = sphi 0, %s32
      %p29 = scmp.ge.s32.totalorder %s28, 4
      %s35 = sphi 0, %s47
      %s36 = sphi 0, %s43
      %s37 = sphi 0, %s35
      %s38 = sphi 0, %s36
      %s39 = sphi 0, %s37
      %s40 = sphi 0, %s38
      %s52 = sphi 0, %s54
      %s55 = sphi 0, %s52
      %s56 = sphi 0, %s55
      %s72 = sphi 0, %s56
      %s80 = sphi 0, %s82
      %s83 = sphi 0, %s80
      %s84 = sphi 0, %s83
      %s100 = sphi 0, %s84
      %s108 = sphi 0, %s110
      %s111 = sphi 0, %s108
      %s112 = sphi 0, %s111
      %s128 = sphi 0, %s112
      %s136 = sphi 0, %s138
      %s139 = sphi 0, %s136
      %s140 = sphi 0, %s139
      %s156 = sphi 0, %s140
      %s164 = sphi 0, %s166
      %s167 = sphi 0, %s164
      %s168 = sphi 0, %s167
      %s184 = sphi 0, %s168
      %s192 = sphi 0, %s194
      %s195 = sphi 0, %s192
      %s196 = sphi 0, %s195
      %s212 = sphi 0, %s196
      %s220 = sphi 0, %s222
      %s223 = sphi 0, %s220
      %s224 = sphi 0, %s223
      %s240 = sphi 0, %s224
      %s248 = sphi 0, %s250
      %s251 = sphi 0, %s248
      %s252 = sphi 0, %s251
      %s268 = sphi 0, %s252
    $region4: #{tpu_custom_call.1} parent=1 // loop_header_branch
      %31 = sbr.rel (%p29) target = $region8
    $region5: #{tpu_custom_call.1} parent=1 // loop_body
      %s33 = ssub.s32 %s28, 1
      %s34 = ssub.s32 %s28, 2
      %s41 = sadd.s32 1, %s36
      %p42 = scmp.ge.s32.totalorder %s41, 1
      %s43 = scalar_select %p42, 0, %s41
      %s44 = sadd.s32 1, %s35
      %s45 = scalar_select %p42, %s44, %s35
      %p46 = scmp.ge.s32.totalorder %s45, 2
      %s47 = scalar_select %p46, 0, %s45
      %s48 = ssub.s32 %s35, %s47
      %s49 = ssub.s32 %s36, %s43
      %s50 = sor.u32 %s48, %s49
      %p51 = scmp.eq.s32.totalorder %s50, 0
      %s53 = sadd.s32 %s52, 1
      %s54 = scalar_select %p51, %s52, %s53
      %p57 = pneg %p51
      %p58 = scmp.eq.s32.totalorder %s28, 1
      %p59 = por %p57, %p58
      %p60 = scmp.ne.s32.totalorder %s52, %s55
      %p61 = scmp.eq.s32.totalorder %s28, 0
      %p62 = por %p60, %p61
      %p63 = scmp.ne.s32.totalorder %s52, %s55
      %p64 = scmp.eq.s32.totalorder %s33, 1
      %p65 = por %p63, %p64
      %p66 = scmp.ne.s32.totalorder %s55, %s56
      %p67 = scmp.eq.s32.totalorder %s33, 0
      %p68 = por %p66, %p67
      %p69 = scmp.ne.s32.totalorder %s55, %s56
      %p70 = scmp.eq.s32.totalorder %s34, 1
      %p71 = por %p69, %p70
      %p73 = scmp.ne.s32.totalorder %s56, %s72
      %p74 = scmp.eq.s32.totalorder %s34, 0
      %p75 = por %p73, %p74
      %s76 = ssub.s32 %s35, %s47
      %s77 = ssub.s32 %s36, %s43
      %s78 = sor.u32 %s76, %s77
      %p79 = scmp.eq.s32.totalorder %s78, 0
      %s81 = sadd.s32 %s80, 1
      %s82 = scalar_select %p79, %s80, %s81
      %p85 = pneg %p79
      %p86 = scmp.eq.s32.totalorder %s28, 1
      %p87 = por %p85, %p86
      %p88 = scmp.ne.s32.totalorder %s80, %s83
      %p89 = scmp.eq.s32.totalorder %s28, 0
      %p90 = por %p88, %p89
      %p91 = scmp.ne.s32.totalorder %s80, %s83
      %p92 = scmp.eq.s32.totalorder %s33, 1
      %p93 = por %p91, %p92
      %p94 = scmp.ne.s32.totalorder %s83, %s84
      %p95 = scmp.eq.s32.totalorder %s33, 0
      %p96 = por %p94, %p95
      %p97 = scmp.ne.s32.totalorder %s83, %s84
      %p98 = scmp.eq.s32.totalorder %s34, 1
      %p99 = por %p97, %p98
      %p101 = scmp.ne.s32.totalorder %s84, %s100
      %p102 = scmp.eq.s32.totalorder %s34, 0
      %p103 = por %p101, %p102
      %s104 = ssub.s32 %s35, %s47
      %s105 = ssub.s32 %s36, %s43
      %s106 = sor.u32 %s104, %s105
      %p107 = scmp.eq.s32.totalorder %s106, 0
      %s109 = sadd.s32 %s108, 1
      %s110 = scalar_select %p107, %s108, %s109
      %p113 = pneg %p107
      %p114 = scmp.eq.s32.totalorder %s28, 1
      %p115 = por %p113, %p114
      %p116 = scmp.ne.s32.totalorder %s108, %s111
      %p117 = scmp.eq.s32.totalorder %s28, 0
      %p118 = por %p116, %p117
      %p119 = scmp.ne.s32.totalorder %s108, %s111
      %p120 = scmp.eq.s32.totalorder %s33, 1
      %p121 = por %p119, %p120
      %p122 = scmp.ne.s32.totalorder %s111, %s112
      %p123 = scmp.eq.s32.totalorder %s33, 0
      %p124 = por %p122, %p123
      %p125 = scmp.ne.s32.totalorder %s111, %s112
      %p126 = scmp.eq.s32.totalorder %s34, 1
      %p127 = por %p125, %p126
      %p129 = scmp.ne.s32.totalorder %s112, %s128
      %p130 = scmp.eq.s32.totalorder %s34, 0
      %p131 = por %p129, %p130
      %s132 = ssub.s32 %s35, %s47
      %s133 = ssub.s32 %s36, %s43
      %s134 = sor.u32 %s132, %s133
      %p135 = scmp.eq.s32.totalorder %s134, 0
      %s137 = sadd.s32 %s136, 1
      %s138 = scalar_select %p135, %s136, %s137
      %p141 = pneg %p135
      %p142 = scmp.eq.s32.totalorder %s28, 1
      %p143 = por %p141, %p142
      %p144 = scmp.ne.s32.totalorder %s136, %s139
      %p145 = scmp.eq.s32.totalorder %s28, 0
      %p146 = por %p144, %p145
      %p147 = scmp.ne.s32.totalorder %s136, %s139
      %p148 = scmp.eq.s32.totalorder %s33, 1
      %p149 = por %p147, %p148
      %p150 = scmp.ne.s32.totalorder %s139, %s140
      %p151 = scmp.eq.s32.totalorder %s33, 0
      %p152 = por %p150, %p151
      %p153 = scmp.ne.s32.totalorder %s139, %s140
      %p154 = scmp.eq.s32.totalorder %s34, 1
      %p155 = por %p153, %p154
      %p157 = scmp.ne.s32.totalorder %s140, %s156
      %p158 = scmp.eq.s32.totalorder %s34, 0
      %p159 = por %p157, %p158
      %s160 = ssub.s32 %s35, %s47
      %s161 = ssub.s32 %s36, %s43
      %s162 = sor.u32 %s160, %s161
      %p163 = scmp.eq.s32.totalorder %s162, 0
      %s165 = sadd.s32 %s164, 1
      %s166 = scalar_select %p163, %s164, %s165
      %p169 = pneg %p163
      %p170 = scmp.eq.s32.totalorder %s28, 1
      %p171 = por %p169, %p170
      %p172 = scmp.ne.s32.totalorder %s164, %s167
      %p173 = scmp.eq.s32.totalorder %s28, 0
      %p174 = por %p172, %p173
      %p175 = scmp.ne.s32.totalorder %s164, %s167
      %p176 = scmp.eq.s32.totalorder %s33, 1
      %p177 = por %p175, %p176
      %p178 = scmp.ne.s32.totalorder %s167, %s168
      %p179 = scmp.eq.s32.totalorder %s33, 0
      %p180 = por %p178, %p179
      %p181 = scmp.ne.s32.totalorder %s167, %s168
      %p182 = scmp.eq.s32.totalorder %s34, 1
      %p183 = por %p181, %p182
      %p185 = scmp.ne.s32.totalorder %s168, %s184
      %p186 = scmp.eq.s32.totalorder %s34, 0
      %p187 = por %p185, %p186
      %s188 = ssub.s32 %s35, %s47
      %s189 = ssub.s32 %s36, %s43
      %s190 = sor.u32 %s188, %s189
      %p191 = scmp.eq.s32.totalorder %s190, 0
      %s193 = sadd.s32 %s192, 1
      %s194 = scalar_select %p191, %s192, %s193
      %p197 = pneg %p191
      %p198 = scmp.eq.s32.totalorder %s28, 1
      %p199 = por %p197, %p198
      %p200 = scmp.ne.s32.totalorder %s192, %s195
      %p201 = scmp.eq.s32.totalorder %s28, 0
      %p202 = por %p200, %p201
      %p203 = scmp.ne.s32.totalorder %s192, %s195
      %p204 = scmp.eq.s32.totalorder %s33, 1
      %p205 = por %p203, %p204
      %p206 = scmp.ne.s32.totalorder %s195, %s196
      %p207 = scmp.eq.s32.totalorder %s33, 0
      %p208 = por %p206, %p207
      %p209 = scmp.ne.s32.totalorder %s195, %s196
      %p210 = scmp.eq.s32.totalorder %s34, 1
      %p211 = por %p209, %p210
      %p213 = scmp.ne.s32.totalorder %s196, %s212
      %p214 = scmp.eq.s32.totalorder %s34, 0
      %p215 = por %p213, %p214
      %s216 = ssub.s32 %s35, %s47
      %s217 = ssub.s32 %s36, %s43
      %s218 = sor.u32 %s216, %s217
      %p219 = scmp.eq.s32.totalorder %s218, 0
      %s221 = sadd.s32 %s220, 1
      %s222 = scalar_select %p219, %s220, %s221
      %p225 = pneg %p219
      %p226 = scmp.eq.s32.totalorder %s28, 1
      %p227 = por %p225, %p226
      %p228 = scmp.ne.s32.totalorder %s220, %s223
      %p229 = scmp.eq.s32.totalorder %s28, 0
      %p230 = por %p228, %p229
      %p231 = scmp.ne.s32.totalorder %s220, %s223
      %p232 = scmp.eq.s32.totalorder %s33, 1
      %p233 = por %p231, %p232
      %p234 = scmp.ne.s32.totalorder %s223, %s224
      %p235 = scmp.eq.s32.totalorder %s33, 0
      %p236 = por %p234, %p235
      %p237 = scmp.ne.s32.totalorder %s223, %s224
      %p238 = scmp.eq.s32.totalorder %s34, 1
      %p239 = por %p237, %p238
      %p241 = scmp.ne.s32.totalorder %s224, %s240
      %p242 = scmp.eq.s32.totalorder %s34, 0
      %p243 = por %p241, %p242
      %s244 = ssub.s32 %s35, %s47
      %s245 = ssub.s32 %s36, %s43
      %s246 = sor.u32 %s244, %s245
      %p247 = scmp.eq.s32.totalorder %s246, 0
      %s249 = sadd.s32 %s248, 1
      %s250 = scalar_select %p247, %s248, %s249
      %p253 = pneg %p247
      %p254 = scmp.eq.s32.totalorder %s28, 1
      %p255 = por %p253, %p254
      %p256 = scmp.ne.s32.totalorder %s248, %s251
      %p257 = scmp.eq.s32.totalorder %s28, 0
      %p258 = por %p256, %p257
      %p259 = scmp.ne.s32.totalorder %s248, %s251
      %p260 = scmp.eq.s32.totalorder %s33, 1
      %p261 = por %p259, %p260
      %p262 = scmp.ne.s32.totalorder %s251, %s252
      %p263 = scmp.eq.s32.totalorder %s33, 0
      %p264 = por %p262, %p263
      %p265 = scmp.ne.s32.totalorder %s251, %s252
      %p266 = scmp.eq.s32.totalorder %s34, 1
      %p267 = por %p265, %p266
      %p269 = scmp.ne.s32.totalorder %s252, %s268
      %p270 = scmp.eq.s32.totalorder %s34, 0
      %p271 = por %p269, %p270
      %p272 = scmp.le.s32.totalorder 1, %s28
      %p273 = scmp.lt.s32.totalorder %s28, 3
      %p274 = pnand %p272, %p273
      %p275 = pneg %p274
      // Predicated region
      $region9: #{tpu_custom_call.1} parent=5 // pred_check
        _
      $region10: #{tpu_custom_call.1} parent=5 // pred_check_branch
        %277 = sbr.rel (%p274) target = $region12
      $region11: #{tpu_custom_call.1} parent=5 // pred_region
        %s278 = ssub.s32 %s28, 1
      $region12: #{tpu_custom_call.1} parent=5 // pred_fallthru
        _
      %p279 = scmp.lt.s32.totalorder %s28, 2
      // Predicated region
      $region13: #{tpu_custom_call.1} parent=5 // pred_check
        %p280 = pneg %p279
      $region14: #{tpu_custom_call.1} parent=5 // pred_check_branch
        %282 = sbr.rel (%p280) target = $region16
      $region15: #{tpu_custom_call.1} parent=5 // pred_region
        // Predicated region
        $region17: #{tpu_custom_call.1} parent=15 // pred_check
          %p283 = pneg %p62
        $region18: #{tpu_custom_call.1} parent=15 // pred_check_branch
          %285 = sbr.rel (%p283) target = $region20
        $region19: #{tpu_custom_call.1} parent=15 // pred_region
          %s286 = sand.u32 %s52, 1
          %s287 = scalar_lea.sflag [#allocation3], %s286
          %s288 = sand.u32 %s52, 1
          %s289 = smul.addr %s288, 2
          %s290 = scalar_lea.vmem [#allocation2], %s289
          %s292 = ssub.s32 32, 32
          %293 = vsyncadd %s287, %s292
          %s294 = sadd.s32 %s36, %s35
          %s295 = smul.addr %s294, 32
          %s296 = scalar_lea.hbm %s0, %s295
          %s298 = sshll.u32 %s290, 4
          %s299 = int_to_ptr.vmem [resolvable:$true] %s298
          %301 = dma.hbm_to_vmem [thread:$0]  %s296, 32, %s299, %s287
        $region20: #{tpu_custom_call.1} parent=15 // pred_fallthru
          _
        // Predicated region
        $region21: #{tpu_custom_call.1} parent=15 // pred_check
          %p302 = pneg %p90
        $region22: #{tpu_custom_call.1} parent=15 // pred_check_branch
          %304 = sbr.rel (%p302) target = $region24
        $region23: #{tpu_custom_call.1} parent=15 // pred_region
          %s305 = sand.u32 %s28, 1
          %s306 = scalar_lea.sflag [#allocation6], %s305
          %s307 = sand.u32 %s80, 1
          %s308 = smul.addr %s307, 8
          %s309 = scalar_lea.vmem [#allocation5], %s308
          %s311 = ssub.s32 128, 128
          %312 = vsyncadd %s306, %s311
          %s313 = smul.addr %s35, 4
          %s314 = sadd.s32 %s36, %s313
          %s315 = smul.addr %s314, 32
          %s316 = scalar_lea.hbm %s1, %s315
          %s317 = sshll.u32 %s309, 4
          %s318 = int_to_ptr.vmem [resolvable:$true] %s317
          %323 = dma.hbm_to_vmem [thread:$0]  %s316, 128, %s318, %s306, 32, 32, 2
        $region24: #{tpu_custom_call.1} parent=15 // pred_fallthru
          _
        // Predicated region
        $region25: #{tpu_custom_call.1} parent=15 // pred_check
          %p324 = pneg %p118
        $region26: #{tpu_custom_call.1} parent=15 // pred_check_branch
          %326 = sbr.rel (%p324) target = $region28
        $region27: #{tpu_custom_call.1} parent=15 // pred_region
          %s327 = sand.u32 %s28, 1
          %s328 = scalar_lea.sflag [#allocation6], %s327
          %s329 = sand.u32 %s108, 1
          %s330 = smul.addr %s329, 2
          %s331 = scalar_lea.vmem [#allocation7], %s330
          %s333 = ssub.s32 32, 32
          %334 = vsyncadd %s328, %s333
          %s335 = sadd.s32 %s36, %s35
          %s336 = smul.addr %s335, 32
          %s337 = scalar_lea.hbm %s2, %s336
          %s339 = sshll.u32 %s331, 4
          %s340 = int_to_ptr.vmem [resolvable:$true] %s339
          %342 = dma.hbm_to_vmem [thread:$0]  %s337, 32, %s340, %s328
        $region28: #{tpu_custom_call.1} parent=15 // pred_fallthru
          _
        // Predicated region
        $region29: #{tpu_custom_call.1} parent=15 // pred_check
          %p343 = pneg %p146
        $region30: #{tpu_custom_call.1} parent=15 // pred_check_branch
          %345 = sbr.rel (%p343) target = $region32
        $region31: #{tpu_custom_call.1} parent=15 // pred_region
          %s346 = sand.u32 %s28, 1
          %s347 = scalar_lea.sflag [#allocation9], %s346
          %s348 = sand.u32 %s136, 1
          %s349 = smul.addr %s348, 8
          %s350 = scalar_lea.vmem [#allocation8], %s349
          %s352 = ssub.s32 128, 128
          %353 = vsyncadd %s347, %s352
          %s354 = smul.addr %s35, 4
          %s355 = sadd.s32 %s36, %s354
          %s356 = smul.addr %s355, 32
          %s357 = scalar_lea.hbm %s3, %s356
          %s358 = sshll.u32 %s350, 4
          %s359 = int_to_ptr.vmem [resolvable:$true] %s358
          %364 = dma.hbm_to_vmem [thread:$0]  %s357, 128, %s359, %s347, 32, 32, 2
        $region32: #{tpu_custom_call.1} parent=15 // pred_fallthru
          _
        // Predicated region
        $region33: #{tpu_custom_call.1} parent=15 // pred_check
          %p365 = pneg %p174
        $region34: #{tpu_custom_call.1} parent=15 // pred_check_branch
          %367 = sbr.rel (%p365) target = $region36
        $region35: #{tpu_custom_call.1} parent=15 // pred_region
          %p368 = scmp.lt.s32.totalorder %s35, 1
          %s369 = scalar_select %p368, %s35, 1
          %p370 = scmp.lt.s32.totalorder %s36, 0
          %s371 = scalar_select %p370, %s36, 0
          %s372 = sadd.s32 %s371, %s369
          %s373 = smul.addr %s372, 2
          %s374 = scalar_lea.vmem %s4, %s373
        $region36: #{tpu_custom_call.1} parent=15 // pred_fallthru
          _
        // Predicated region
        $region37: #{tpu_custom_call.1} parent=15 // pred_check
          %p375 = pneg %p202
        $region38: #{tpu_custom_call.1} parent=15 // pred_check_branch
          %377 = sbr.rel (%p375) target = $region40
        $region39: #{tpu_custom_call.1} parent=15 // pred_region
          %s378 = sand.u32 %s28, 1
          %s379 = scalar_lea.sflag [#allocation9], %s378
          %s380 = sand.u32 %s192, 1
          %s381 = smul.addr %s380, 8
          %s382 = scalar_lea.vmem [#allocation10], %s381
          %s384 = ssub.s32 128, 128
          %385 = vsyncadd %s379, %s384
          %s386 = smul.addr %s35, 4
          %s387 = sadd.s32 %s36, %s386
          %s388 = smul.addr %s387, 32
          %s389 = scalar_lea.hbm %s5, %s388
          %s390 = sshll.u32 %s382, 4
          %s391 = int_to_ptr.vmem [resolvable:$true] %s390
          %396 = dma.hbm_to_vmem [thread:$0]  %s389, 128, %s391, %s379, 32, 32, 2
        $region40: #{tpu_custom_call.1} parent=15 // pred_fallthru
          _
        // Predicated region
        $region41: #{tpu_custom_call.1} parent=15 // pred_check
          %p397 = pneg %p230
        $region42: #{tpu_custom_call.1} parent=15 // pred_check_branch
          %399 = sbr.rel (%p397) target = $region44
        $region43: #{tpu_custom_call.1} parent=15 // pred_region
          %s400 = sand.u32 %s220, 1
          %s401 = scalar_lea.sflag [#allocation12], %s400
          %s402 = sand.u32 %s220, 1
          %s403 = smul.addr %s402, 2
          %s404 = scalar_lea.vmem [#allocation11], %s403
          %s406 = ssub.s32 32, 32
          %407 = vsyncadd %s401, %s406
          %s408 = smul.addr %s35, 4
          %s409 = sadd.s32 %s36, %s408
          %s410 = smul.addr %s409, 32
          %s411 = scalar_lea.hbm %s6, %s410
          %s413 = sshll.u32 %s404, 4
          %s414 = int_to_ptr.vmem [resolvable:$true] %s413
          %416 = dma.hbm_to_vmem [thread:$0]  %s411, 32, %s414, %s401
        $region44: #{tpu_custom_call.1} parent=15 // pred_fallthru
          _
      $region16: #{tpu_custom_call.1} parent=5 // pred_fallthru
        _
      %p417 = scmp.le.s32.totalorder 1, %s28
      %p418 = scmp.lt.s32.totalorder %s28, 3
      %p419 = pnand %p417, %p418
      %p420 = pneg %p419
      // Predicated region
      $region45: #{tpu_custom_call.1} parent=5 // pred_check
        _
      $region46: #{tpu_custom_call.1} parent=5 // pred_check_branch
        %422 = sbr.rel (%p419) target = $region48
      $region47: #{tpu_custom_call.1} parent=5 // pred_region
        %s423 = ssub.s32 %s28, 1
        %s424 = sand.u32 %s55, 1
        %s425 = scalar_lea.sflag [#allocation3], %s424
        %s426 = sand.u32 %s55, 1
        %s427 = smul.addr %s426, 2
        %s428 = scalar_lea.vmem [#allocation2], %s427
        // Predicated region
        $region49: #{tpu_custom_call.1} parent=47 // pred_check
          %p429 = pneg %p68
        $region50: #{tpu_custom_call.1} parent=47 // pred_check_branch
          %431 = sbr.rel (%p429) target = $region52
        $region51: #{tpu_custom_call.1} parent=47 // pred_region
          %432 = dma.done %s425, 32
        $region52: #{tpu_custom_call.1} parent=47 // pred_fallthru
          _
        %s433 = sand.u32 %s33, 1
        %s434 = scalar_lea.sflag [#allocation6], %s433
        %s435 = sand.u32 %s83, 1
        %s436 = smul.addr %s435, 8
        %s437 = scalar_lea.vmem [#allocation5], %s436
        // Predicated region
        $region53: #{tpu_custom_call.1} parent=47 // pred_check
          %p438 = pneg %p96
        $region54: #{tpu_custom_call.1} parent=47 // pred_check_branch
          %440 = sbr.rel (%p438) target = $region56
        $region55: #{tpu_custom_call.1} parent=47 // pred_region
          %441 = dma.done %s434, 128
        $region56: #{tpu_custom_call.1} parent=47 // pred_fallthru
          _
        %s442 = sand.u32 %s33, 1
        %s443 = scalar_lea.sflag [#allocation6], %s442
        %s444 = sand.u32 %s111, 1
        %s445 = smul.addr %s444, 2
        %s446 = scalar_lea.vmem [#allocation7], %s445
        // Predicated region
        $region57: #{tpu_custom_call.1} parent=47 // pred_check
          %p447 = pneg %p124
        $region58: #{tpu_custom_call.1} parent=47 // pred_check_branch
          %449 = sbr.rel (%p447) target = $region60
        $region59: #{tpu_custom_call.1} parent=47 // pred_region
          %450 = dma.done %s443, 32
        $region60: #{tpu_custom_call.1} parent=47 // pred_fallthru
          _
        %s451 = sand.u32 %s33, 1
        %s452 = scalar_lea.sflag [#allocation9], %s451
        %s453 = sand.u32 %s139, 1
        %s454 = smul.addr %s453, 8
        %s455 = scalar_lea.vmem [#allocation8], %s454
        // Predicated region
        $region61: #{tpu_custom_call.1} parent=47 // pred_check
          %p456 = pneg %p152
        $region62: #{tpu_custom_call.1} parent=47 // pred_check_branch
          %458 = sbr.rel (%p456) target = $region64
        $region63: #{tpu_custom_call.1} parent=47 // pred_region
          %459 = dma.done %s452, 128
        $region64: #{tpu_custom_call.1} parent=47 // pred_fallthru
          _
        %s460 = sand.u32 %s33, 1
        %s461 = scalar_lea.sflag [#allocation9], %s460
        %s462 = sand.u32 %s195, 1
        %s463 = smul.addr %s462, 8
        %s464 = scalar_lea.vmem [#allocation10], %s463
        // Predicated region
        $region65: #{tpu_custom_call.1} parent=47 // pred_check
          %p465 = pneg %p208
        $region66: #{tpu_custom_call.1} parent=47 // pred_check_branch
          %467 = sbr.rel (%p465) target = $region68
        $region67: #{tpu_custom_call.1} parent=47 // pred_region
          %468 = dma.done %s461, 128
        $region68: #{tpu_custom_call.1} parent=47 // pred_fallthru
          _
        %s469 = sand.u32 %s223, 1
        %s470 = scalar_lea.sflag [#allocation12], %s469
        %s471 = sand.u32 %s223, 1
        %s472 = smul.addr %s471, 2
        %s473 = scalar_lea.vmem [#allocation11], %s472
        // Predicated region
        $region69: #{tpu_custom_call.1} parent=47 // pred_check
          %p474 = pneg %p236
        $region70: #{tpu_custom_call.1} parent=47 // pred_check_branch
          %476 = sbr.rel (%p474) target = $region72
        $region71: #{tpu_custom_call.1} parent=47 // pred_region
          %477 = dma.done %s470, 32
        $region72: #{tpu_custom_call.1} parent=47 // pred_fallthru
          _
        %s478 = sand.u32 %s55, 1
        %s479 = scalar_lea.sflag [#allocation3], %s478
        %s480 = sand.u32 %s55, 1
        %s481 = smul.addr %s480, 2
        %s482 = scalar_lea.vmem [#allocation2], %s481
        %p483 = pneg %p68
        %p484 = pneg %p65
        %s485 = sand.u32 %s33, 1
        %s486 = scalar_lea.sflag [#allocation6], %s485
        %s487 = sand.u32 %s83, 1
        %s488 = smul.addr %s487, 8
        %s489 = scalar_lea.vmem [#allocation5], %s488
        %p490 = pneg %p96
        %p491 = pneg %p93
        %s492 = sand.u32 %s33, 1
        %s493 = scalar_lea.sflag [#allocation6], %s492
        %s494 = sand.u32 %s111, 1
        %s495 = smul.addr %s494, 2
        %s496 = scalar_lea.vmem [#allocation7], %s495
        %p497 = pneg %p124
        %p498 = pneg %p121
        %s499 = sand.u32 %s33, 1
        %s500 = scalar_lea.sflag [#allocation9], %s499
        %s501 = sand.u32 %s139, 1
        %s502 = smul.addr %s501, 8
        %s503 = scalar_lea.vmem [#allocation8], %s502
        %p504 = pneg %p152
        %p505 = pneg %p149
        %p506 = scmp.lt.s32.totalorder %s37, 1
        %s507 = scalar_select %p506, %s37, 1
        %p508 = scmp.lt.s32.totalorder %s38, 0
        %s509 = scalar_select %p508, %s38, 0
        %s510 = sadd.s32 %s509, %s507
        %s511 = smul.addr %s510, 2
        %s512 = scalar_lea.vmem %s4, %s511
        %p513 = pneg %p180
        %p514 = pneg %p177
        %s515 = sand.u32 %s33, 1
        %s516 = scalar_lea.sflag [#allocation9], %s515
        %s517 = sand.u32 %s195, 1
        %s518 = smul.addr %s517, 8
        %s519 = scalar_lea.vmem [#allocation10], %s518
        %p520 = pneg %p208
        %p521 = pneg %p205
        %s522 = sand.u32 %s223, 1
        %s523 = scalar_lea.sflag [#allocation12], %s522
        %s524 = sand.u32 %s223, 1
        %s525 = smul.addr %s524, 2
        %s526 = scalar_lea.vmem [#allocation11], %s525
        %p527 = pneg %p236
        %p528 = pneg %p233
        %p529 = pneg %p264
        %p530 = pneg %p261
        %s531 = sand.u32 %s251, 1
        %s532 = scalar_lea.sflag [#allocation4], %s531
        %s533 = sand.u32 %s251, 1
        %s534 = smul.addr %s533, 8
        %s535 = scalar_lea.vmem [#allocation13], %s534
        %p536 = scmp.lt.s32.totalorder %s37, 1
        %s537 = scalar_select %p536, %s37, 1
        %p538 = scmp.lt.s32.totalorder %s38, 0
        %s539 = scalar_select %p538, %s38, 0
        %s540 = sadd.s32 %s539, %s537
        %s541 = smul.addr %s540, 2
        %s542 = scalar_lea.vmem %s4, %s541
        %v543 = vld [vmem:[%s428] sm:$0x3]
        %v544 = vld [vmem:[%s437] sm:$0x3]
        %v545 = vld [vmem:[%s437 + $0x2] sm:$0x3]
        %v546 = vld [vmem:[%s437 + $0x4] sm:$0x3]
        %v547 = vld [vmem:[%s437 + $0x6] sm:$0x3]
        %v548 = vsub.f32 %v544, 0.5
        %v549 = vsub.f32 %v545, 0.5
        %v550 = vsub.f32 %v546, 0.5
        %v551 = vsub.f32 %v547, 0.5
        %v552 = vmul.f32 %v543, %v548
        %v553 = vmul.f32 %v543, %v549
        %v554 = vmul.f32 %v543, %v550
        %v555 = vmul.f32 %v543, %v551
        %v556 = vadd.f32 %v552, 0.5
        %v557 = vadd.f32 %v553, 0.5
        %v558 = vadd.f32 %v554, 0.5
        %v559 = vadd.f32 %v555, 0.5
        %v560 = vld [vmem:[%s446] sm:$0x3]
        %v561 = vld [vmem:[%s455] sm:$0x3]
        %v562 = vld [vmem:[%s455 + $0x2] sm:$0x3]
        %v563 = vld [vmem:[%s455 + $0x4] sm:$0x3]
        %v564 = vld [vmem:[%s455 + $0x6] sm:$0x3]
        %v565 = vsub.f32 %v561, 0.5
        %v566 = vsub.f32 %v562, 0.5
        %v567 = vsub.f32 %v563, 0.5
        %v568 = vsub.f32 %v564, 0.5
        %v569 = vmul.f32 %v560, %v565
        %v570 = vmul.f32 %v560, %v566
        %v571 = vmul.f32 %v560, %v567
        %v572 = vmul.f32 %v560, %v568
        %v573 = vadd.f32 %v556, %v569
        %v574 = vadd.f32 %v557, %v570
        %v575 = vadd.f32 %v558, %v571
        %v576 = vadd.f32 %v559, %v572
        %v577 = vld [vmem:[%s542] sm:$0x3]
        %v578 = vld [vmem:[%s464] sm:$0x3]
        %v579 = vld [vmem:[%s464 + $0x2] sm:$0x3]
        %v580 = vld [vmem:[%s464 + $0x4] sm:$0x3]
        %v581 = vld [vmem:[%s464 + $0x6] sm:$0x3]
        %v582 = vsub.f32 %v578, 0.5
        %v583 = vsub.f32 %v579, 0.5
        %v584 = vsub.f32 %v580, 0.5
        %v585 = vsub.f32 %v581, 0.5
        %v586 = vmul.f32 %v577, %v582
        %v587 = vmul.f32 %v577, %v583
        %v588 = vmul.f32 %v577, %v584
        %v589 = vmul.f32 %v577, %v585
        %v590 = vadd.f32 %v573, %v586
        %v591 = vadd.f32 %v574, %v587
        %v592 = vadd.f32 %v575, %v588
        %v593 = vadd.f32 %v576, %v589
        %594 = vst [vmem:[%s535] sm:$0x3] %v590
        %595 = vst [vmem:[%s535 + $0x2] sm:$0x3] %v591
        %596 = vst [vmem:[%s535 + $0x4] sm:$0x3] %v592
        %597 = vst [vmem:[%s535 + $0x6] sm:$0x3] %v593
        %v598 = vld [vmem:[%s473] sm:$0x3]
        %599 = vst [vmem:[%s535] sm:$0x3] %v598
        %s600 = sand.u32 %s251, 1
        %s601 = scalar_lea.sflag [#allocation4], %s600
        %s602 = sand.u32 %s251, 1
        %s603 = smul.addr %s602, 8
        %s604 = scalar_lea.vmem [#allocation13], %s603
        // Predicated region
        $region73: #{tpu_custom_call.1} parent=47 // pred_check
          %p605 = pneg %p261
        $region74: #{tpu_custom_call.1} parent=47 // pred_check_branch
          %607 = sbr.rel (%p605) target = $region76
        $region75: #{tpu_custom_call.1} parent=47 // pred_region
          %s609 = ssub.s32 128, 128
          %610 = vsyncadd %s601, %s609
          %s611 = smul.addr %s37, 4
          %s612 = sadd.s32 %s38, %s611
          %s613 = smul.addr %s612, 32
          %s614 = scalar_lea.hbm %s7, %s613
          %s615 = sshll.u32 %s604, 4
          %s616 = int_to_ptr.vmem [resolvable:$true] %s615
          %621 = dma.vmem_to_hbm [thread:$0]  %s616, 128, %s614, %s601, 32, 32, 2
        $region76: #{tpu_custom_call.1} parent=47 // pred_fallthru
          _
      $region48: #{tpu_custom_call.1} parent=5 // pred_fallthru
        _
      %p622 = scmp.le.s32.totalorder 2, %s28
      // Predicated region
      $region77: #{tpu_custom_call.1} parent=5 // pred_check
        %p623 = pneg %p622
      $region78: #{tpu_custom_call.1} parent=5 // pred_check_branch
        %625 = sbr.rel (%p623) target = $region80
      $region79: #{tpu_custom_call.1} parent=5 // pred_region
        %s626 = ssub.s32 %s28, 2
        // Predicated region
        $region81: #{tpu_custom_call.1} parent=79 // pred_check
          %p627 = pneg %p267
        $region82: #{tpu_custom_call.1} parent=79 // pred_check_branch
          %629 = sbr.rel (%p627) target = $region84
        $region83: #{tpu_custom_call.1} parent=79 // pred_region
          %s630 = sand.u32 %s252, 1
          %s631 = scalar_lea.sflag [#allocation4], %s630
          %s632 = sand.u32 %s252, 1
          %s633 = smul.addr %s632, 8
          %s634 = scalar_lea.vmem [#allocation13], %s633
          %635 = dma.done %s631, 128
        $region84: #{tpu_custom_call.1} parent=79 // pred_fallthru
          _
      $region80: #{tpu_custom_call.1} parent=5 // pred_fallthru
        _
    $region6: #{tpu_custom_call.1} parent=1 // loop_footer
      %s32 = sadd.s32 1, %s28
    $region7: #{tpu_custom_call.1} parent=1 // loop_footer_branch
      %27 = sbr.rel target = $region3
    $region8: #{tpu_custom_call.1} parent=1 // loop_exit
      _
    %636 = vsyncpa [#allocation3], 1
    %s637 = scalar_lea.sflag [#allocation3], 1
    %638 = vsyncpa %s637, 1
    %639 = vsyncpa [#allocation6], 1
    %s640 = scalar_lea.sflag [#allocation6], 1
    %641 = vsyncpa %s640, 1
    %642 = vsyncpa [#allocation9], 1
    %s643 = scalar_lea.sflag [#allocation9], 1
    %644 = vsyncpa %s643, 1
    %645 = vsyncpa [#allocation12], 1
    %s646 = scalar_lea.sflag [#allocation12], 1
    %647 = vsyncpa %s646, 1
    %648 = vsyncpa [#allocation4], 1
    %s649 = scalar_lea.sflag [#allocation4], 1
    %650 = vsyncpa %s649, 1

</llo_original>
